<compile_context>
chip_gen: v7x
topology: tpu7x:2x2x1
jax: 0.10.0
libtpu: 0.0.40
codegen_flags: <defaults>
</compile_context>

<pallas_src>
import functools

import jax
import jax.numpy as jnp
from jax.experimental import pallas as pl
from jax.experimental.pallas import tpu as pltpu


def _qnet_kernel(x_ref, w1_ref, b1_ref, w2_ref, b2_ref, o_ref):
    # hidden = relu(x @ W1 + b1) -- MXU matmul, f32 accumulation.
    h = jnp.dot(x_ref[...], w1_ref[...], preferred_element_type=jnp.float32)
    # Bias lives in row 0 of an (8, hid_p) tile; broadcast over the batch tile.
    h = jnp.maximum(h + b1_ref[0:1, :], 0.0)
    # out = hidden @ W2 + b2
    out = jnp.dot(h, w2_ref[...], preferred_element_type=jnp.float32)
    o_ref[...] = (out + b2_ref[0:1, :]).astype(o_ref.dtype)


def _round_up(n, m):
    return ((n + m - 1) // m) * m


def _pad_to(a, shape):
    return jnp.pad(a, [(0, s - d) for d, s in zip(a.shape, shape)])


def _choose_batch_tile(b_8, max_tile):
    """Balanced, sublane-aligned batch tile with minimal over-padding."""
    if b_8 <= max_tile:
        return b_8
    n_tiles = -(-b_8 // max_tile)                 # ceil div
    return _round_up(-(-b_8 // n_tiles), 8)       # balanced tiles, multiple of 8


def pad_params(w1, b1, w2, b2):
    """Pad weights/biases to lane-dense (128-wide) tiles ONCE; cache the result.

    w1 : (in, hidden)   b1 : (1, hidden)
    w2 : (hidden, out)  b2 : (1, out)
    (weights stored pre-transposed vs. torch's (out, in) layout)
    """
    in_dim, hid_dim = w1.shape
    out_dim = w2.shape[1]
    in_p = _round_up(in_dim, 128)
    hid_p = _round_up(hid_dim, 128)
    out_p = _round_up(out_dim, 128)
    w1_p = _pad_to(w1, (in_p, hid_p))
    w2_p = _pad_to(w2, (hid_p, out_p))
    # Bias kept tiny: row 0 holds the bias, rows 1..7 are zero padding.
    b1_p = _pad_to(b1.reshape(1, -1), (8, hid_p))
    b2_p = _pad_to(b2.reshape(1, -1), (8, out_p))
    return w1_p, b1_p, w2_p, b2_p


@functools.partial(jax.jit, static_argnames=("out_dim", "max_batch_tile"))
def linear_qnet_forward(x, w1_p, b1_p, w2_p, b2_p, *, out_dim,
                        max_batch_tile=1024):
    """Fused forward pass: relu(x @ W1 + b1) @ W2 + b2.

    x                     : (B, in) float32 (unpadded)
    w1_p, b1_p, w2_p, b2_p: pre-padded params from pad_params()
    returns (B, out_dim) float32
    """
    B, in_dim = x.shape
    in_p, hid_p = w1_p.shape
    out_p = w2_p.shape[1]

    # Batch padding: only to a multiple of 8 sublanes, then balanced tiles.
    b_8 = _round_up(B, 8)
    TB = _choose_batch_tile(b_8, max_batch_tile)
    B_p = _round_up(b_8, TB)

    # Only x is padded per call (zero padding is numerically exact).
    x_p = _pad_to(x, (B_p, in_p))

    grid = (B_p // TB,)
    flops = 2 * B_p * in_p * hid_p + 2 * B_p * hid_p * out_p
    bytes_accessed = 4 * (B_p * in_p + in_p * hid_p + hid_p * out_p
                          + 8 * (hid_p + out_p) + B_p * out_p)

    out_padded = pl.pallas_call(
        _qnet_kernel,
        out_shape=jax.ShapeDtypeStruct((B_p, out_p), x.dtype),
        grid=grid,
        in_specs=[
            pl.BlockSpec((TB, in_p), lambda i: (i, 0)),      # x tile per batch block
            pl.BlockSpec((in_p, hid_p), lambda i: (0, 0)),   # W1 resident across grid
            pl.BlockSpec((8, hid_p), lambda i: (0, 0)),      # b1 (tiny, resident)
            pl.BlockSpec((hid_p, out_p), lambda i: (0, 0)),  # W2 resident across grid
            pl.BlockSpec((8, out_p), lambda i: (0, 0)),      # b2 (tiny, resident)
        ],
        out_specs=pl.BlockSpec((TB, out_p), lambda i: (i, 0)),
        compiler_params=pltpu.CompilerParams(
            dimension_semantics=("parallel",)),  # shards batch tiles over v7x's 2 TCs
        cost_estimate=pl.CostEstimate(
            flops=flops, transcendentals=0, bytes_accessed=bytes_accessed),
    )(x_p, w1_p, b1_p, w2_p, b2_p)

    return out_padded[:B, :out_dim]


def init_params(key, input_size, hidden_size, output_size):
    """Deterministic init mimicking torch.nn.Linear's default
    U(-1/sqrt(fan_in), 1/sqrt(fan_in))."""
    k1, k2, k3, k4 = jax.random.split(key, 4)
    bound1 = 1.0 / (input_size ** 0.5)
    bound2 = 1.0 / (hidden_size ** 0.5)
    w1 = jax.random.uniform(k1, (input_size, hidden_size), jnp.float32,
                            -bound1, bound1)
    b1 = jax.random.uniform(k2, (1, hidden_size), jnp.float32,
                            -bound1, bound1)
    w2 = jax.random.uniform(k3, (hidden_size, output_size), jnp.float32,
                            -bound2, bound2)
    b2 = jax.random.uniform(k4, (1, output_size), jnp.float32,
                            -bound2, bound2)
    return w1, b1, w2, b2


# TODO(synk): Linear_QNet.save() (torch checkpoint I/O) and the full RL step
# (TD target, loss, SGD update) are host/training-side and not implemented
# here; only the module's forward pass is fused into the kernel.

if __name__ == "__main__":
    # Classic snake Q-net sizes, kept small.
    batch, input_size, hidden_size, output_size = 8, 11, 32, 3

    key = jax.random.PRNGKey(0)
    kx, kp, kb = jax.random.split(key, 3)
    x = jax.random.normal(kx, (batch, input_size), jnp.float32)
    w1, b1, w2, b2 = init_params(kp, input_size, hidden_size, output_size)

    # Weights/biases padded once and cached (not per call).
    padded_params = pad_params(w1, b1, w2, b2)

    # Small (act-time) batch.
    out = jax.block_until_ready(
        linear_qnet_forward(x, *padded_params, out_dim=output_size))
    ref = jnp.maximum(x @ w1 + b1, 0.0) @ w2 + b2
    assert out.shape == (batch, output_size)
    assert jnp.allclose(out, ref, atol=1e-5, rtol=1e-5)

    # Replay-batch sized input: exercises balanced-tile batch padding
    # (304 rows processed for B=300 instead of 512).
    xb = jax.random.normal(kb, (300, input_size), jnp.float32)
    out_b = jax.block_until_ready(
        linear_qnet_forward(xb, *padded_params, out_dim=output_size))
    ref_b = jnp.maximum(xb @ w1 + b1, 0.0) @ w2 + b2
    assert out_b.shape == (300, output_size)
    assert jnp.allclose(out_b, ref_b, atol=1e-5, rtol=1e-5)

    # Large replay batch: exercises the multi-tile (grid > 1) "parallel" path.
    xl = jax.random.normal(kb, (2048, input_size), jnp.float32)
    out_l = jax.block_until_ready(
        linear_qnet_forward(xl, *padded_params, out_dim=output_size))
    ref_l = jnp.maximum(xl @ w1 + b1, 0.0) @ w2 + b2
    assert out_l.shape == (2048, output_size)
    assert jnp.allclose(out_l, ref_l, atol=1e-5, rtol=1e-5)

    print("KERNEL_OK")
</pallas_src>

<mosaic_0001>
module attributes {stable_mosaic.version = 11 : i64} {
  func.func @_qnet_kernel(%arg0: i32, %arg1: memref<8x128xf32, #tpu.memory_space<vmem>>, %arg2: memref<128x128xf32, #tpu.memory_space<vmem>>, %arg3: memref<8x128xf32, #tpu.memory_space<vmem>>, %arg4: memref<128x128xf32, #tpu.memory_space<vmem>>, %arg5: memref<8x128xf32, #tpu.memory_space<vmem>>, %arg6: memref<8x128xf32, #tpu.memory_space<vmem>>) attributes {dimension_semantics = [#tpu.dimension_semantics<parallel>], iteration_bounds = array<i64: 1>, scalar_prefetch = 0 : i64, scratch_operands = 0 : i64, tpu.core_type = #tpu.core_type<tc>, window_params = [{transform_indices = @transform_0, window_bounds = array<i64: 8, 128>}, {pipeline_mode = #tpu.pipeline_mode<synchronous>, transform_indices = @transform_1, window_bounds = array<i64: 128, 128>}, {pipeline_mode = #tpu.pipeline_mode<synchronous>, transform_indices = @transform_2, window_bounds = array<i64: 8, 128>}, {pipeline_mode = #tpu.pipeline_mode<synchronous>, transform_indices = @transform_3, window_bounds = array<i64: 128, 128>}, {pipeline_mode = #tpu.pipeline_mode<synchronous>, transform_indices = @transform_4, window_bounds = array<i64: 8, 128>}, {transform_indices = @transform_5, window_bounds = array<i64: 8, 128>}]} {
    %c0 = arith.constant 0 : index
    %c0_0 = arith.constant 0 : index
    %0 = vector.load %arg1[%c0, %c0_0] : memref<8x128xf32, #tpu.memory_space<vmem>>, vector<8x128xf32>
    %c0_1 = arith.constant 0 : index
    %c0_2 = arith.constant 0 : index
    %1 = vector.load %arg2[%c0_1, %c0_2] : memref<128x128xf32, #tpu.memory_space<vmem>>, vector<128x128xf32>
    %cst = arith.constant dense<0.000000e+00> : vector<8x128xf32>
    %2 = tpu.matmul %0, %1, %cst {dimension_numbers = #tpu.dot_dimension_numbers<[1], [0], [0], [1], [0, 0, 1, 1], [], []>} : vector<8x128xf32>, vector<128x128xf32>, vector<8x128xf32> -> vector<8x128xf32>
    %c0_3 = arith.constant 0 : index
    %c0_4 = arith.constant 0 : index
    %3 = vector.load %arg3[%c0_3, %c0_4] : memref<8x128xf32, #tpu.memory_space<vmem>>, vector<1x128xf32>
    %4 = vector.broadcast %3 : vector<1x128xf32> to vector<8x128xf32>
    %5 = arith.addf %2, %4 : vector<8x128xf32>
    %cst_5 = arith.constant 0.000000e+00 : f32
    %6 = vector.broadcast %cst_5 : f32 to vector<8x128xf32>
    %7 = arith.maximumf %5, %6 : vector<8x128xf32>
    %c0_6 = arith.constant 0 : index
    %c0_7 = arith.constant 0 : index
    %8 = vector.load %arg4[%c0_6, %c0_7] : memref<128x128xf32, #tpu.memory_space<vmem>>, vector<128x128xf32>
    %cst_8 = arith.constant dense<0.000000e+00> : vector<8x128xf32>
    %9 = tpu.matmul %7, %8, %cst_8 {dimension_numbers = #tpu.dot_dimension_numbers<[1], [0], [0], [1], [0, 0, 1, 1], [], []>} : vector<8x128xf32>, vector<128x128xf32>, vector<8x128xf32> -> vector<8x128xf32>
    %c0_9 = arith.constant 0 : index
    %c0_10 = arith.constant 0 : index
    %10 = vector.load %arg5[%c0_9, %c0_10] : memref<8x128xf32, #tpu.memory_space<vmem>>, vector<1x128xf32>
    %11 = vector.broadcast %10 : vector<1x128xf32> to vector<8x128xf32>
    %12 = arith.addf %9, %11 : vector<8x128xf32>
    %c0_11 = arith.constant 0 : index
    %c0_12 = arith.constant 0 : index
    %13 = vector.load %arg6[%c0_11, %c0_12] : memref<8x128xf32, #tpu.memory_space<vmem>>, vector<8x128xf32>
    tpu.vector_store %arg6[%c0_11, %c0_12], %12 {strides = array<i32>} : memref<8x128xf32, #tpu.memory_space<vmem>>, vector<8x128xf32>,
    return
  }
  func.func @transform_0(%arg0: i32) -> (i32, i32) {
    %c0_i32 = arith.constant 0 : i32
    %c0_i32_0 = arith.constant 0 : i32
    return %arg0, %c0_i32 : i32, i32
  }
  func.func @transform_1(%arg0: i32) -> (i32, i32) {
    %c0_i32 = arith.constant 0 : i32
    %c0_i32_0 = arith.constant 0 : i32
    %c0_i32_1 = arith.constant 0 : i32
    return %c0_i32, %c0_i32_0 : i32, i32
  }
  func.func @transform_2(%arg0: i32) -> (i32, i32) {
    %c0_i32 = arith.constant 0 : i32
    %c0_i32_0 = arith.constant 0 : i32
    %c0_i32_1 = arith.constant 0 : i32
    return %c0_i32, %c0_i32_0 : i32, i32
  }
  func.func @transform_3(%arg0: i32) -> (i32, i32) {
    %c0_i32 = arith.constant 0 : i32
    %c0_i32_0 = arith.constant 0 : i32
    %c0_i32_1 = arith.constant 0 : i32
    return %c0_i32, %c0_i32_0 : i32, i32
  }
  func.func @transform_4(%arg0: i32) -> (i32, i32) {
    %c0_i32 = arith.constant 0 : i32
    %c0_i32_0 = arith.constant 0 : i32
    %c0_i32_1 = arith.constant 0 : i32
    return %c0_i32, %c0_i32_0 : i32, i32
  }
  func.func @transform_5(%arg0: i32) -> (i32, i32) {
    %c0_i32 = arith.constant 0 : i32
    %c0_i32_0 = arith.constant 0 : i32
    return %arg0, %c0_i32 : i32, i32
  }
}

</mosaic_0001>

<llo_original>
// kernel: linear_qnet_forward.1
$region0: #{linear_qnet_forward.1}
  #allocation0 [shape = 'u32[]', space=smem, size = 0x4, offset = 0x4, fixed_abs, tag = 'smem constant byte address 0x4 - core index']
  #allocation1 [shape = 'u32[144,128]{1,0:T(1,128)}', space=vmem, size = 0x12000, scoped, tag = 'internal scratch']
  %s0 = inlined_call_operand.vmem [shape: f32[8,128], index: 0, kind: input, shape index: {}]
  %s1 = inlined_call_operand.hbm [shape: f32[128,128], index: 1, kind: input, shape index: {}]
  %s2 = inlined_call_operand.vmem [shape: f32[8,128], index: 2, kind: input, shape index: {}]
  %s3 = inlined_call_operand.hbm [shape: f32[128,128], index: 3, kind: input, shape index: {}]
  %s4 = inlined_call_operand.vmem [shape: f32[8,128], index: 4, kind: input, shape index: {}]
  %s5 = inlined_call_operand.vmem [shape: f32[8,128], index: 5, kind: output, shape index: {}]
  %s6 = sld [smem:[#allocation0]]
  $region38: #{linear_qnet_forward.1} parent=0
    _
  %s8 = ssub.s32 1, %s6
  %s9 = scalar_select 0, %s8, %s6
  $region1: #{linear_qnet_forward.1} parent=0
    #allocation2 [shape = 'u8[65536]{0}', space=vmem, size = 0x10000, scoped, tag = 'input window, operand 1, single buffered']
    #allocation3 [shape = 's32[1]{0}', space=sflag, size = 0x4, scoped, tag = 'scoped memory for linear_qnet_forward.1']
    #allocation4 [shape = 'u8[65536]{0}', space=vmem, size = 0x10000, scoped, tag = 'input window, operand 3, single buffered']
    #allocation5 [shape = 's32[1]{0}', space=sflag, size = 0x4, scoped, tag = 'scoped memory for linear_qnet_forward.1']
    %10 = vsyncpa [#allocation3], 0
    %11 = vsyncpa [#allocation5], 0
    // Predicated region
    $region2: #{linear_qnet_forward.1} parent=1 // pred_check
      _
    $region3: #{linear_qnet_forward.1} parent=1 // pred_check_branch
      %13 = sbr.rel (0) target = $region5
    $region4: #{linear_qnet_forward.1} parent=1 // pred_region
      _
    $region5: #{linear_qnet_forward.1} parent=1 // pred_fallthru
      _
    // Predicated region
    $region6: #{linear_qnet_forward.1} parent=1 // pred_check
      _
    $region7: #{linear_qnet_forward.1} parent=1 // pred_check_branch
      %15 = sbr.rel (0) target = $region9
    $region8: #{linear_qnet_forward.1} parent=1 // pred_region
      %s17 = ssub.s32 2048, 2048
      %18 = vsyncadd [#allocation3], %s17
      %s19 = sshll.u32 [#allocation2], 4
      %s20 = int_to_ptr.vmem [resolvable:$true] %s19
      %25 = dma.hbm_to_vmem [thread:$0]  %s1, 2048, %s20, [#allocation3], 128, 128, 8
    $region9: #{linear_qnet_forward.1} parent=1 // pred_fallthru
      _
    // Predicated region
    $region10: #{linear_qnet_forward.1} parent=1 // pred_check
      _
    $region11: #{linear_qnet_forward.1} parent=1 // pred_check_branch
      %27 = sbr.rel (0) target = $region13
    $region12: #{linear_qnet_forward.1} parent=1 // pred_region
      _
    $region13: #{linear_qnet_forward.1} parent=1 // pred_fallthru
      _
    // Predicated region
    $region14: #{linear_qnet_forward.1} parent=1 // pred_check
      _
    $region15: #{linear_qnet_forward.1} parent=1 // pred_check_branch
      %29 = sbr.rel (0) target = $region17
    $region16: #{linear_qnet_forward.1} parent=1 // pred_region
      %s31 = ssub.s32 2048, 2048
      %32 = vsyncadd [#allocation5], %s31
      %s33 = sshll.u32 [#allocation4], 4
      %s34 = int_to_ptr.vmem [resolvable:$true] %s33
      %39 = dma.hbm_to_vmem [thread:$0]  %s3, 2048, %s34, [#allocation5], 128, 128, 8
    $region17: #{linear_qnet_forward.1} parent=1 // pred_fallthru
      _
    // Predicated region
    $region18: #{linear_qnet_forward.1} parent=1 // pred_check
      _
    $region19: #{linear_qnet_forward.1} parent=1 // pred_check_branch
      %41 = sbr.rel (0) target = $region21
    $region20: #{linear_qnet_forward.1} parent=1 // pred_region
      _
    $region21: #{linear_qnet_forward.1} parent=1 // pred_fallthru
      _
    // Predicated region
    $region22: #{linear_qnet_forward.1} parent=1 // pred_check
      _
    $region23: #{linear_qnet_forward.1} parent=1 // pred_check_branch
      %43 = sbr.rel (0) target = $region25
    $region24: #{linear_qnet_forward.1} parent=1 // pred_region
      %44 = dma.done [#allocation3], 2048
    $region25: #{linear_qnet_forward.1} parent=1 // pred_fallthru
      _
    // Predicated region
    $region26: #{linear_qnet_forward.1} parent=1 // pred_check
      _
    $region27: #{linear_qnet_forward.1} parent=1 // pred_check_branch
      %46 = sbr.rel (0) target = $region29
    $region28: #{linear_qnet_forward.1} parent=1 // pred_region
      %47 = dma.done [#allocation5], 2048
    $region29: #{linear_qnet_forward.1} parent=1 // pred_fallthru
      _
    %v48 = vld [vmem:[%s0] sm:$0xff]
    %v49 = vld [vmem:[#allocation2] sm:$0xff]
    %v50 = vld [vmem:[#allocation2 + $0x8] sm:$0xff]
    %v51 = vld [vmem:[#allocation2 + $0x10] sm:$0xff]
    %v52 = vld [vmem:[#allocation2 + $0x18] sm:$0xff]
    %v53 = vld [vmem:[#allocation2 + $0x20] sm:$0xff]
    %v54 = vld [vmem:[#allocation2 + $0x28] sm:$0xff]
    %v55 = vld [vmem:[#allocation2 + $0x30] sm:$0xff]
    %v56 = vld [vmem:[#allocation2 + $0x38] sm:$0xff]
    %v57 = vld [vmem:[#allocation2 + $0x40] sm:$0xff]
    %v58 = vld [vmem:[#allocation2 + $0x48] sm:$0xff]
    %v59 = vld [vmem:[#allocation2 + $0x50] sm:$0xff]
    %v60 = vld [vmem:[#allocation2 + $0x58] sm:$0xff]
    %v61 = vld [vmem:[#allocation2 + $0x60] sm:$0xff]
    %v62 = vld [vmem:[#allocation2 + $0x68] sm:$0xff]
    %v63 = vld [vmem:[#allocation2 + $0x70] sm:$0xff]
    %v64 = vld [vmem:[#allocation2 + $0x78] sm:$0xff]
    %v65 = vld [vmem:[%s2] sm:$0x1]
    %v66 = vlaneseq
    %v67 = vshrl.u32 %v66, 7
    %v68 = vsub.s32 0, %v67
    %v69 = vrot.slane %v65, %v68
    %70 = vmatprep.subr.mxu0 0.0
    %71 = vmatpush1.msra.mxu0 %v49
    %72 = vmatprep.subr.mxu0 0.0
    %73 = vmatpush1.msra.mxu0 %v50
    %74 = vmatprep.subr.mxu0 0.0
    %75 = vmatpush1.msra.mxu0 %v51
    %76 = vmatprep.subr.mxu0 0.0
    %77 = vmatpush1.msra.mxu0 %v52
    %78 = vmatprep.subr.mxu0 0.0
    %79 = vmatpush1.msra.mxu0 %v53
    %80 = vmatprep.subr.mxu0 0.0
    %81 = vmatpush1.msra.mxu0 %v54
    %82 = vmatprep.subr.mxu0 0.0
    %83 = vmatpush1.msra.mxu0 %v55
    %84 = vmatprep.subr.mxu0 0.0
    %85 = vmatpush1.msra.mxu0 %v56
    %86 = vmatprep.subr.mxu0 0.0
    %87 = vmatpush1.msra.mxu0 %v57
    %88 = vmatprep.subr.mxu0 0.0
    %89 = vmatpush1.msra.mxu0 %v58
    %90 = vmatprep.subr.mxu0 0.0
    %91 = vmatpush1.msra.mxu0 %v59
    %92 = vmatprep.subr.mxu0 0.0
    %93 = vmatpush1.msra.mxu0 %v60
    %94 = vmatprep.subr.mxu0 0.0
    %95 = vmatpush1.msra.mxu0 %v61
    %96 = vmatprep.subr.mxu0 0.0
    %97 = vmatpush1.msra.mxu0 %v62
    %98 = vmatprep.subr.mxu0 0.0
    %99 = vmatpush1.msra.mxu0 %v63
    %100 = vmatprep.subr.mxu0 0.0
    %101 = vmatpush1.msra.mxu0 %v64
    %102 = vmatprep.subr.mxu0 0.0
    %103 = vmatpush1.msra.mxu0 0.0
    %104 = vmatprep.subr.mxu0 0.0
    %105 = vmatpush1.msra.mxu0 0.0
    %106 = vmatprep.subr.mxu0 0.0
    %107 = vmatpush1.msra.mxu0 0.0
    %108 = vmatprep.subr.mxu0 0.0
    %109 = vmatpush1.msra.mxu0 0.0
    %110 = vmatprep.subr.mxu0 0.0
    %111 = vmatpush1.msra.mxu0 0.0
    %112 = vmatprep.subr.mxu0 0.0
    %113 = vmatpush1.msra.mxu0 0.0
    %114 = vmatprep.subr.mxu0 0.0
    %115 = vmatpush1.msra.mxu0 0.0
    %116 = vmatprep.subr.mxu0 0.0
    %117 = vmatpush1.msra.mxu0 0.0
    %118 = vmatprep.subr.mxu0 0.0
    %119 = vmatpush1.msra.mxu0 0.0
    %120 = vmatprep.subr.mxu0 0.0
    %121 = vmatpush1.msra.mxu0 0.0
    %122 = vmatprep.subr.mxu0 0.0
    %123 = vmatpush1.msra.mxu0 0.0
    %124 = vmatprep.subr.mxu0 0.0
    %125 = vmatpush1.msra.mxu0 0.0
    %126 = vmatprep.subr.mxu0 0.0
    %127 = vmatpush1.msra.mxu0 0.0
    %128 = vmatprep.subr.mxu0 0.0
    %129 = vmatpush1.msra.mxu0 0.0
    %130 = vmatprep.subr.mxu0 0.0
    %131 = vmatpush1.msra.mxu0 0.0
    %132 = vmatprep.subr.mxu0 0.0
    %133 = vmatpush1.msra.mxu0 0.0
    %134 = vmatprep.mubr.f32.mxu0 0.0
    %135 = vmatmul.mubr.f32.gmra.mrb[0].mxu0 %v48
    %v136 = vpop.f32.mrb[0].mxu0
    %v137 = vadd.f32 %v69, %v136
    %v138 = vpop.f32.mrb[0].mxu0
    %139 = vdwg.mxu0
    %v140 = vmax.f32 %v137, 0.0
    %v141 = vld [vmem:[#allocation4] sm:$0xff]
    %v142 = vld [vmem:[#allocation4 + $0x8] sm:$0xff]
    %v143 = vld [vmem:[#allocation4 + $0x10] sm:$0xff]
    %v144 = vld [vmem:[#allocation4 + $0x18] sm:$0xff]
    %v145 = vld [vmem:[#allocation4 + $0x20] sm:$0xff]
    %v146 = vld [vmem:[#allocation4 + $0x28] sm:$0xff]
    %v147 = vld [vmem:[#allocation4 + $0x30] sm:$0xff]
    %v148 = vld [vmem:[#allocation4 + $0x38] sm:$0xff]
    %v149 = vld [vmem:[#allocation4 + $0x40] sm:$0xff]
    %v150 = vld [vmem:[#allocation4 + $0x48] sm:$0xff]
    %v151 = vld [vmem:[#allocation4 + $0x50] sm:$0xff]
    %v152 = vld [vmem:[#allocation4 + $0x58] sm:$0xff]
    %v153 = vld [vmem:[#allocation4 + $0x60] sm:$0xff]
    %v154 = vld [vmem:[#allocation4 + $0x68] sm:$0xff]
    %v155 = vld [vmem:[#allocation4 + $0x70] sm:$0xff]
    %v156 = vld [vmem:[#allocation4 + $0x78] sm:$0xff]
    %v157 = vld [vmem:[%s4] sm:$0x1]
    %v158 = vlaneseq
    %v159 = vshrl.u32 %v158, 7
    %v160 = vsub.s32 0, %v159
    %v161 = vrot.slane %v157, %v160
    %162 = vmatprep.subr.mxu0 0.0
    %163 = vmatpush1.msra.mxu0 %v141
    %164 = vmatprep.subr.mxu0 0.0
    %165 = vmatpush1.msra.mxu0 %v142
    %166 = vmatprep.subr.mxu0 0.0
    %167 = vmatpush1.msra.mxu0 %v143
    %168 = vmatprep.subr.mxu0 0.0
    %169 = vmatpush1.msra.mxu0 %v144
    %170 = vmatprep.subr.mxu0 0.0
    %171 = vmatpush1.msra.mxu0 %v145
    %172 = vmatprep.subr.mxu0 0.0
    %173 = vmatpush1.msra.mxu0 %v146
    %174 = vmatprep.subr.mxu0 0.0
    %175 = vmatpush1.msra.mxu0 %v147
    %176 = vmatprep.subr.mxu0 0.0
    %177 = vmatpush1.msra.mxu0 %v148
    %178 = vmatprep.subr.mxu0 0.0
    %179 = vmatpush1.msra.mxu0 %v149
    %180 = vmatprep.subr.mxu0 0.0
    %181 = vmatpush1.msra.mxu0 %v150
    %182 = vmatprep.subr.mxu0 0.0
    %183 = vmatpush1.msra.mxu0 %v151
    %184 = vmatprep.subr.mxu0 0.0
    %185 = vmatpush1.msra.mxu0 %v152
    %186 = vmatprep.subr.mxu0 0.0
    %187 = vmatpush1.msra.mxu0 %v153
    %188 = vmatprep.subr.mxu0 0.0
    %189 = vmatpush1.msra.mxu0 %v154
    %190 = vmatprep.subr.mxu0 0.0
    %191 = vmatpush1.msra.mxu0 %v155
    %192 = vmatprep.subr.mxu0 0.0
    %193 = vmatpush1.msra.mxu0 %v156
    %194 = vmatprep.subr.mxu0 0.0
    %195 = vmatpush1.msra.mxu0 0.0
    %196 = vmatprep.subr.mxu0 0.0
    %197 = vmatpush1.msra.mxu0 0.0
    %198 = vmatprep.subr.mxu0 0.0
    %199 = vmatpush1.msra.mxu0 0.0
    %200 = vmatprep.subr.mxu0 0.0
    %201 = vmatpush1.msra.mxu0 0.0
    %202 = vmatprep.subr.mxu0 0.0
    %203 = vmatpush1.msra.mxu0 0.0
    %204 = vmatprep.subr.mxu0 0.0
    %205 = vmatpush1.msra.mxu0 0.0
    %206 = vmatprep.subr.mxu0 0.0
    %207 = vmatpush1.msra.mxu0 0.0
    %208 = vmatprep.subr.mxu0 0.0
    %209 = vmatpush1.msra.mxu0 0.0
    %210 = vmatprep.subr.mxu0 0.0
    %211 = vmatpush1.msra.mxu0 0.0
    %212 = vmatprep.subr.mxu0 0.0
    %213 = vmatpush1.msra.mxu0 0.0
    %214 = vmatprep.subr.mxu0 0.0
    %215 = vmatpush1.msra.mxu0 0.0
    %216 = vmatprep.subr.mxu0 0.0
    %217 = vmatpush1.msra.mxu0 0.0
    %218 = vmatprep.subr.mxu0 0.0
    %219 = vmatpush1.msra.mxu0 0.0
    %220 = vmatprep.subr.mxu0 0.0
    %221 = vmatpush1.msra.mxu0 0.0
    %222 = vmatprep.subr.mxu0 0.0
    %223 = vmatpush1.msra.mxu0 0.0
    %224 = vmatprep.subr.mxu0 0.0
    %225 = vmatpush1.msra.mxu0 0.0
    %226 = vmatprep.mubr.f32.mxu0 0.0
    %227 = vmatmul.mubr.f32.gmra.mrb[0].mxu0 %v140
    %v228 = vpop.f32.mrb[0].mxu0
    %v229 = vadd.f32 %v161, %v228
    %v230 = vpop.f32.mrb[0].mxu0
    %231 = vdwg.mxu0
    %232 = vst [vmem:[%s5] sm:$0xff] %v229
    // Predicated region
    $region30: #{linear_qnet_forward.1} parent=1 // pred_check
      _
    $region31: #{linear_qnet_forward.1} parent=1 // pred_check_branch
      %234 = sbr.rel (0) target = $region33
    $region32: #{linear_qnet_forward.1} parent=1 // pred_region
      _
    $region33: #{linear_qnet_forward.1} parent=1 // pred_fallthru
      _
    // Predicated region
    $region34: #{linear_qnet_forward.1} parent=1 // pred_check
      _
    $region35: #{linear_qnet_forward.1} parent=1 // pred_check_branch
      %236 = sbr.rel (0) target = $region37
    $region36: #{linear_qnet_forward.1} parent=1 // pred_region
      _
    $region37: #{linear_qnet_forward.1} parent=1 // pred_fallthru
      _
    %237 = vsyncpa [#allocation3], 1
    %238 = vsyncpa [#allocation5], 1

</llo_original>
